<compile_context>
chip_gen: v6e
topology: v6e:2x2x1
jax: 0.10.0
libtpu: 0.0.40
codegen_flags: <defaults>
</compile_context>

<pallas_src>
import functools

import jax
import jax.numpy as jnp
from jax import lax
from jax.experimental import pallas as pl
from jax.experimental.pallas import tpu as pltpu

EPS = 1e-12
LANE = 128  # TPU lane width


def _loss_kernel(x_ref, ot_ref, o_ref, acc_ref, *, rows, spc, needs_mask):
    # x_ref : (1, TM, LANE)      -- input probabilities
    # ot_ref: (1, 2, TM, LANE)   -- [target_half, weights_half] for same rows
    # o_ref : (1, 1, 8, LANE)    -- per-(batch, chunk) partial sums (lane-dense)
    # acc_ref: VMEM (8, LANE) f32 accumulator
    r = pl.program_id(2)

    @pl.when(r == 0)
    def _():
        acc_ref[...] = jnp.zeros_like(acc_ref)

    x = x_ref[0].astype(jnp.float32)       # (TM, LANE)
    t = ot_ref[0, 0].astype(jnp.float32)   # target   (TM, LANE)
    w = ot_ref[0, 1].astype(jnp.float32)   # weights  (TM, LANE)

    # out1 - buf2 + t*buf2  ==  w * ((t - 1) * log(1 - x + eps) - t * log(x + eps))
    log_x = jnp.log(x + EPS)
    log_1mx = jnp.log((1.0 - x) + EPS)
    val = w * ((t - 1.0) * log_1mx - t * log_x)

    tm, lane = val.shape
    if needs_mask:
        # Zero contributions from rows past the true extent (partial last block).
        c = pl.program_id(1)
        row0 = (c * spc + r) * tm
        row_ids = row0 + lax.broadcasted_iota(jnp.int32, (tm, lane), 0)
        val = jnp.where(row_ids < rows, val, 0.0)

    # Fold TM rows -> 8 rows with vreg-wise adds (pure VPU, no cross-lane work);
    # small (8, LANE) accumulator keeps VMEM free for big input tiles.
    acc_ref[...] += val.reshape(tm // 8, 8, lane).sum(axis=0)

    @pl.when(r == pl.num_programs(2) - 1)
    def _():
        o_ref[0, 0] = acc_ref[...]


def _round_up(x, m):
    return ((x + m - 1) // m) * m


def _block_row_cap():
    """Per-generation tile cap: bigger tiles pay off most on v7x (fast HBM)."""
    try:
        info = pltpu.get_tpu_info()
        vmem = getattr(info, "vmem_capacity_bytes", None)
        if vmem is not None and vmem <= 64 * 1024 * 1024:
            return 4096          # v7x: 64 MiB VMEM / ~3.2 TB/s HBM
    except Exception:
        pass
    return 2048                  # v5e / v6e safe default


def _pick_block_rows(rows, cap):
    """Multiple-of-16 tile (bf16-safe); tail rows are masked in-kernel."""
    if rows <= cap:
        if rows % 8 == 0:
            return rows          # exact fit, no mask needed
        return min(_round_up(rows, 16), cap)
    return cap


def custom_loss(inp, otarget):
    """inp: (N, C, H, W); otarget: (N, 2*C, H, W). Returns scalar float32."""
    n, c, h, w = inp.shape
    assert otarget.shape == (n, 2 * c, h, w), "otarget must have 2*C channels"

    chw = c * h * w
    assert chw % LANE == 0, (
        "wrapper requires C*H*W divisible by 128; pad inputs otherwise"
    )  # TODO(synk): padding path for non-multiple-of-128 image sizes

    rows = chw // LANE                      # lane-dense rows per batch element
    cap = _block_row_cap()
    tm = _pick_block_rows(rows, cap)
    needs_mask = (rows % tm) != 0

    steps = pl.cdiv(rows, tm)
    # Extra parallel chunk axis so both v7x TensorCores stay busy at small N.
    n_chunks = 2 if (steps >= 2 and steps % 2 == 0) else 1
    spc = steps // n_chunks                 # steps per chunk

    # Pure row-major reshapes (no copies): the target half and weights half of
    # otarget stay in place and are addressed by the BlockSpec below.
    x3 = inp.reshape(n, rows, LANE)
    ot4 = otarget.reshape(n, 2, rows, LANE)

    total = n * chw
    x_bytes = jnp.dtype(inp.dtype).itemsize
    ot_bytes = jnp.dtype(otarget.dtype).itemsize

    # Explicit VMEM budget sized from the chosen tile (double-buffered inputs).
    block_bytes = tm * LANE * (x_bytes + 2 * ot_bytes)
    vmem_limit = min(int(2 * block_bytes * 1.25) + (2 << 20), 96 * 1024 * 1024)

    cost = pl.CostEstimate(
        flops=8 * total,
        transcendentals=2 * total,
        bytes_accessed=total * (x_bytes + 2 * ot_bytes)
        + n * n_chunks * 8 * LANE * 4,
    )

    kernel = functools.partial(
        _loss_kernel, rows=rows, spc=spc, needs_mask=needs_mask)

    partials = pl.pallas_call(
        kernel,
        out_shape=jax.ShapeDtypeStruct((n, n_chunks, 8, LANE), jnp.float32),
        grid_spec=pltpu.PrefetchScalarGridSpec(
            num_scalar_prefetch=0,
            grid=(n, n_chunks, spc),
            in_specs=[
                pl.BlockSpec((1, tm, LANE),
                             lambda i, c, r: (i, c * spc + r, 0)),
                pl.BlockSpec((1, 2, tm, LANE),
                             lambda i, c, r: (i, 0, c * spc + r, 0)),
            ],
            out_specs=pl.BlockSpec((1, 1, 8, LANE),
                                   lambda i, c, r: (i, c, 0, 0)),
            scratch_shapes=[pltpu.VMEM((8, LANE), jnp.float32)],
        ),
        compiler_params=pltpu.CompilerParams(
            dimension_semantics=("parallel", "parallel", "arbitrary"),
            vmem_limit_bytes=vmem_limit),
        cost_estimate=cost,
    )(x3, ot4)

    return jnp.sum(partials) / jnp.float32(total)


def custom_loss_ref(inp, otarget):
    """Pure-JAX reference mirroring the PyTorch module structure."""
    c = inp.shape[1]
    target = otarget[:, :c].astype(jnp.float32)
    weights = otarget[:, c:].astype(jnp.float32)
    x = inp.astype(jnp.float32)
    buf1 = jnp.log(x + EPS) * weights
    out1 = -(target * buf1)
    buf2 = jnp.log((x * -1.0 + 1.0) + EPS) * weights
    return jnp.mean(out1 - buf2 + target * buf2)


if __name__ == "__main__":
    key = jax.random.PRNGKey(0)
    k1, k2, k3 = jax.random.split(key, 3)

    N, C, H, W = 2, 4, 16, 16
    # input: probabilities in (0, 1)
    inp = jax.random.uniform(k1, (N, C, H, W), dtype=jnp.float32,
                             minval=0.01, maxval=0.99)
    # target in [0, 1], weights positive
    target = jax.random.uniform(k2, (N, C, H, W), dtype=jnp.float32)
    weights = jax.random.uniform(k3, (N, C, H, W), dtype=jnp.float32,
                                 minval=0.5, maxval=1.5)
    otarget = jnp.concatenate([target, weights], axis=1)  # (N, 2C, H, W)

    out = custom_loss(inp, otarget)
    out = jax.block_until_ready(out)

    ref = custom_loss_ref(inp, otarget)
    assert jnp.allclose(out, ref, rtol=1e-5, atol=1e-5), (out, ref)

    print("KERNEL_OK")
</pallas_src>

<mosaic_0001>
module attributes {stable_mosaic.version = 11 : i64} {
  func.func @_loss_kernel(%arg0: i32, %arg1: i32, %arg2: i32, %arg3: memref<1x8x128xf32, #tpu.memory_space<vmem>>, %arg4: memref<1x2x8x128xf32, #tpu.memory_space<vmem>>, %arg5: memref<1x1x8x128xf32, #tpu.memory_space<vmem>>, %arg6: memref<8x128xf32, #tpu.memory_space<vmem>>) attributes {dimension_semantics = [#tpu.dimension_semantics<parallel>, #tpu.dimension_semantics<parallel>, #tpu.dimension_semantics<arbitrary>], iteration_bounds = array<i64: 2, 1, 1>, scalar_prefetch = 0 : i64, scratch_operands = 1 : i64, tpu.core_type = #tpu.core_type<tc>, window_params = [{transform_indices = @transform_0, window_bounds = array<i64: 1, 8, 128>}, {transform_indices = @transform_1, window_bounds = array<i64: 1, 2, 8, 128>}, {transform_indices = @transform_2, window_bounds = array<i64: 1, 1, 8, 128>}]} {
    %c0_i32 = arith.constant 0 : i32
    %0 = arith.cmpi eq, %arg2, %c0_i32 : i32
    %1 = arith.extui %0 : i1 to i32
    %c0_i32_0 = arith.constant 0 : i32
    %2 = arith.cmpi ne, %1, %c0_i32_0 : i32
    scf.if %2 {
      %cst_20 = arith.constant 0.000000e+00 : f32
      %31 = vector.broadcast %cst_20 : f32 to vector<8x128xf32>
      %c0_21 = arith.constant 0 : index
      %c0_22 = arith.constant 0 : index
      %32 = vector.load %arg6[%c0_21, %c0_22] : memref<8x128xf32, #tpu.memory_space<vmem>>, vector<8x128xf32>
      tpu.vector_store %arg6[%c0_21, %c0_22], %31 {strides = array<i32>} : memref<8x128xf32, #tpu.memory_space<vmem>>, vector<8x128xf32>,
    } else {
    }
    %c0 = arith.constant 0 : index
    %c0_1 = arith.constant 0 : index
    %c0_2 = arith.constant 0 : index
    %3 = vector.load %arg3[%c0, %c0_1, %c0_2] : memref<1x8x128xf32, #tpu.memory_space<vmem>>, vector<1x8x128xf32>
    %4 = vector.shape_cast %3 : vector<1x8x128xf32> to vector<8x128xf32>
    %c0_3 = arith.constant 0 : index
    %c0_4 = arith.constant 0 : index
    %c0_5 = arith.constant 0 : index
    %c0_6 = arith.constant 0 : index
    %5 = vector.load %arg4[%c0_3, %c0_4, %c0_5, %c0_6] : memref<1x2x8x128xf32, #tpu.memory_space<vmem>>, vector<1x1x8x128xf32>
    %6 = vector.shape_cast %5 : vector<1x1x8x128xf32> to vector<8x128xf32>
    %c0_7 = arith.constant 0 : index
    %c1 = arith.constant 1 : index
    %c0_8 = arith.constant 0 : index
    %c0_9 = arith.constant 0 : index
    %7 = vector.load %arg4[%c0_7, %c1, %c0_8, %c0_9] : memref<1x2x8x128xf32, #tpu.memory_space<vmem>>, vector<1x1x8x128xf32>
    %8 = vector.shape_cast %7 : vector<1x1x8x128xf32> to vector<8x128xf32>
    %cst = arith.constant 9.99999996E-13 : f32
    %9 = vector.broadcast %cst : f32 to vector<8x128xf32>
    %10 = arith.addf %4, %9 : vector<8x128xf32>
    %11 = math.log %10 : vector<8x128xf32>
    %cst_10 = arith.constant 1.000000e+00 : f32
    %12 = vector.broadcast %cst_10 : f32 to vector<8x128xf32>
    %13 = arith.subf %12, %4 : vector<8x128xf32>
    %cst_11 = arith.constant 9.99999996E-13 : f32
    %14 = vector.broadcast %cst_11 : f32 to vector<8x128xf32>
    %15 = arith.addf %13, %14 : vector<8x128xf32>
    %16 = math.log %15 : vector<8x128xf32>
    %cst_12 = arith.constant 1.000000e+00 : f32
    %17 = vector.broadcast %cst_12 : f32 to vector<8x128xf32>
    %18 = arith.subf %6, %17 : vector<8x128xf32>
    %19 = arith.mulf %18, %16 : vector<8x128xf32>
    %20 = arith.mulf %6, %11 : vector<8x128xf32>
    %21 = arith.subf %19, %20 : vector<8x128xf32>
    %22 = arith.mulf %8, %21 : vector<8x128xf32>
    %c0_13 = arith.constant 0 : index
    %c0_14 = arith.constant 0 : index
    %23 = vector.load %arg6[%c0_13, %c0_14] : memref<8x128xf32, #tpu.memory_space<vmem>>, vector<8x128xf32>
    %24 = vector.shape_cast %22 : vector<8x128xf32> to vector<1x8x128xf32>
    %cst_15 = arith.constant dense<0.000000e+00> : vector<8x128xf32>
    %25 = vector.multi_reduction <add>, %24, %cst_15 [0] : vector<1x8x128xf32> to vector<8x128xf32>
    %26 = arith.addf %23, %25 : vector<8x128xf32>
    %c0_16 = arith.constant 0 : index
    %c0_17 = arith.constant 0 : index
    %27 = vector.load %arg6[%c0_16, %c0_17] : memref<8x128xf32, #tpu.memory_space<vmem>>, vector<8x128xf32>
    tpu.vector_store %arg6[%c0_16, %c0_17], %26 {strides = array<i32>} : memref<8x128xf32, #tpu.memory_space<vmem>>, vector<8x128xf32>,
    %c0_i32_18 = arith.constant 0 : i32
    %28 = arith.cmpi eq, %arg2, %c0_i32_18 : i32
    %29 = arith.extui %28 : i1 to i32
    %c0_i32_19 = arith.constant 0 : i32
    %30 = arith.cmpi ne, %29, %c0_i32_19 : i32
    scf.if %30 {
      %c0_20 = arith.constant 0 : index
      %c0_21 = arith.constant 0 : index
      %31 = vector.load %arg6[%c0_20, %c0_21] : memref<8x128xf32, #tpu.memory_space<vmem>>, vector<8x128xf32>
      %c0_22 = arith.constant 0 : index
      %c0_23 = arith.constant 0 : index
      %c0_24 = arith.constant 0 : index
      %c0_25 = arith.constant 0 : index
      %32 = vector.load %arg5[%c0_22, %c0_23, %c0_24, %c0_25] : memref<1x1x8x128xf32, #tpu.memory_space<vmem>>, vector<1x1x8x128xf32>
      %33 = vector.shape_cast %32 : vector<1x1x8x128xf32> to vector<8x128xf32>
      %34 = vector.shape_cast %31 : vector<8x128xf32> to vector<1x1x8x128xf32>
      tpu.vector_store %arg5[%c0_22, %c0_23, %c0_24, %c0_25], %34 {strides = array<i32>} : memref<1x1x8x128xf32, #tpu.memory_space<vmem>>, vector<1x1x8x128xf32>,
    } else {
    }
    return
  }
  func.func @transform_0(%arg0: i32, %arg1: i32, %arg2: i32) -> (i32, i32, i32) {
    %c1_i32 = arith.constant 1 : i32
    %0 = arith.muli %arg1, %c1_i32 : i32
    %1 = arith.addi %0, %arg2 : i32
    %c0_i32 = arith.constant 0 : i32
    %c0_i32_0 = arith.constant 0 : i32
    return %arg0, %1, %c0_i32 : i32, i32, i32
  }
  func.func @transform_1(%arg0: i32, %arg1: i32, %arg2: i32) -> (i32, i32, i32, i32) {
    %c1_i32 = arith.constant 1 : i32
    %0 = arith.muli %arg1, %c1_i32 : i32
    %1 = arith.addi %0, %arg2 : i32
    %c0_i32 = arith.constant 0 : i32
    %c0_i32_0 = arith.constant 0 : i32
    %c0_i32_1 = arith.constant 0 : i32
    return %arg0, %c0_i32, %1, %c0_i32_0 : i32, i32, i32, i32
  }
  func.func @transform_2(%arg0: i32, %arg1: i32, %arg2: i32) -> (i32, i32, i32, i32) {
    %c0_i32 = arith.constant 0 : i32
    %c0_i32_0 = arith.constant 0 : i32
    %c0_i32_1 = arith.constant 0 : i32
    return %arg0, %arg1, %c0_i32, %c0_i32_0 : i32, i32, i32, i32
  }
}

</mosaic_0001>

<llo_original>
// kernel: tpu_custom_call.1
$region0: #{tpu_custom_call.1}
  #allocation0 [shape = 'u32[]', space=smem, size = 0x4, offset = 0x4, fixed_abs, tag = 'smem constant byte address 0x4 - core index']
  #allocation1 [shape = 'u32[144,128]{1,0:T(1,128)}', space=vmem, size = 0x12000, scoped, tag = 'internal scratch']
  #allocation2 [shape = 'f32[8,128]{1,0:T(8,128)}', space=vmem, size = 0x1000, scoped, tag = 'scratch operand']
  %s0 = inlined_call_operand.hbm [shape: f32[2,8,128], index: 0, kind: input, shape index: {}]
  %s1 = inlined_call_operand.hbm [shape: f32[2,2,8,128], index: 1, kind: input, shape index: {}]
  %s2 = inlined_call_operand.hbm [shape: f32[2,1,8,128], index: 2, kind: output, shape index: {}]
  %s3 = sld [smem:[#allocation0]]
  $region57: #{tpu_custom_call.1} parent=0
    _
  %s5 = ssub.s32 1, %s3
  %s6 = scalar_select 0, %s5, %s3
  $region1: #{tpu_custom_call.1} parent=0
    #allocation3 [shape = 'u8[8192]{0}', space=vmem, size = 0x2000, scoped, tag = 'input window, operand 0']
    #allocation4 [shape = 's32[2]{0}', space=sflag, size = 0x8, scoped, tag = 'scoped memory for tpu_custom_call.1']
    #allocation5 [shape = 's32[2]{0}', space=sflag, size = 0x8, scoped, tag = 'scoped memory for tpu_custom_call.1']
    #allocation6 [shape = 'u8[16384]{0}', space=vmem, size = 0x4000, scoped, tag = 'input window, operand 1']
    #allocation7 [shape = 's32[2]{0}', space=sflag, size = 0x8, scoped, tag = 'scoped memory for tpu_custom_call.1']
    #allocation8 [shape = 'u8[8192]{0}', space=vmem, size = 0x2000, scoped, tag = 'output window, operand 0']
    %7 = vsyncpa [#allocation4], 0
    %s8 = scalar_lea.sflag [#allocation4], 1
    %9 = vsyncpa %s8, 0
    %10 = vsyncpa [#allocation7], 0
    %s11 = scalar_lea.sflag [#allocation7], 1
    %12 = vsyncpa %s11, 0
    %13 = vsyncpa [#allocation5], 0
    %s14 = scalar_lea.sflag [#allocation5], 1
    %15 = vsyncpa %s14, 0
    loop: start=0, step=1, limit=4
    $region2: #{tpu_custom_call.1} parent=1 // loop_pre_header
      _
    $region3: #{tpu_custom_call.1} parent=1 // loop_header
      %s17 = sphi 0, %s21
      %p18 = scmp.ge.s32.totalorder %s17, 4
      %s24 = sphi 0, %s43
      %s25 = sphi 0, %s39
      %s26 = sphi 0, %s35
      %s27 = sphi 0, %s24
      %s28 = sphi 0, %s25
      %s29 = sphi 0, %s26
      %s30 = sphi 0, %s27
      %s31 = sphi 0, %s28
      %s32 = sphi 0, %s29
      %s50 = sphi 0, %s52
      %s53 = sphi 0, %s50
      %s54 = sphi 0, %s53
      %s70 = sphi 0, %s54
      %s80 = sphi 0, %s82
      %s83 = sphi 0, %s80
      %s84 = sphi 0, %s83
      %s100 = sphi 0, %s84
      %s108 = sphi 0, %s110
      %s111 = sphi 0, %s108
      %s112 = sphi 0, %s111
      %s128 = sphi 0, %s112
    $region4: #{tpu_custom_call.1} parent=1 // loop_header_branch
      %20 = sbr.rel (%p18) target = $region8
    $region5: #{tpu_custom_call.1} parent=1 // loop_body
      %s22 = ssub.s32 %s17, 1
      %s23 = ssub.s32 %s17, 2
      %s33 = sadd.s32 1, %s26
      %p34 = scmp.ge.s32.totalorder %s33, 1
      %s35 = scalar_select %p34, 0, %s33
      %s36 = sadd.s32 1, %s25
      %s37 = scalar_select %p34, %s36, %s25
      %p38 = scmp.ge.s32.totalorder %s37, 1
      %s39 = scalar_select %p38, 0, %s37
      %s40 = sadd.s32 1, %s24
      %s41 = scalar_select %p38, %s40, %s24
      %p42 = scmp.ge.s32.totalorder %s41, 2
      %s43 = scalar_select %p42, 0, %s41
      %s44 = sadd.s32 %s25, %s26
      %s45 = sadd.s32 %s39, %s35
      %s46 = ssub.s32 %s24, %s43
      %s47 = ssub.s32 %s44, %s45
      %s48 = sor.u32 %s46, %s47
      %p49 = scmp.eq.s32.totalorder %s48, 0
      %s51 = sadd.s32 %s50, 1
      %s52 = scalar_select %p49, %s50, %s51
      %p55 = pneg %p49
      %p56 = scmp.eq.s32.totalorder %s17, 1
      %p57 = por %p55, %p56
      %p58 = scmp.ne.s32.totalorder %s50, %s53
      %p59 = scmp.eq.s32.totalorder %s17, 0
      %p60 = por %p58, %p59
      %p61 = scmp.ne.s32.totalorder %s50, %s53
      %p62 = scmp.eq.s32.totalorder %s22, 1
      %p63 = por %p61, %p62
      %p64 = scmp.ne.s32.totalorder %s53, %s54
      %p65 = scmp.eq.s32.totalorder %s22, 0
      %p66 = por %p64, %p65
      %p67 = scmp.ne.s32.totalorder %s53, %s54
      %p68 = scmp.eq.s32.totalorder %s23, 1
      %p69 = por %p67, %p68
      %p71 = scmp.ne.s32.totalorder %s54, %s70
      %p72 = scmp.eq.s32.totalorder %s23, 0
      %p73 = por %p71, %p72
      %s74 = sadd.s32 %s25, %s26
      %s75 = sadd.s32 %s39, %s35
      %s76 = ssub.s32 %s24, %s43
      %s77 = ssub.s32 %s74, %s75
      %s78 = sor.u32 %s76, %s77
      %p79 = scmp.eq.s32.totalorder %s78, 0
      %s81 = sadd.s32 %s80, 1
      %s82 = scalar_select %p79, %s80, %s81
      %p85 = pneg %p79
      %p86 = scmp.eq.s32.totalorder %s17, 1
      %p87 = por %p85, %p86
      %p88 = scmp.ne.s32.totalorder %s80, %s83
      %p89 = scmp.eq.s32.totalorder %s17, 0
      %p90 = por %p88, %p89
      %p91 = scmp.ne.s32.totalorder %s80, %s83
      %p92 = scmp.eq.s32.totalorder %s22, 1
      %p93 = por %p91, %p92
      %p94 = scmp.ne.s32.totalorder %s83, %s84
      %p95 = scmp.eq.s32.totalorder %s22, 0
      %p96 = por %p94, %p95
      %p97 = scmp.ne.s32.totalorder %s83, %s84
      %p98 = scmp.eq.s32.totalorder %s23, 1
      %p99 = por %p97, %p98
      %p101 = scmp.ne.s32.totalorder %s84, %s100
      %p102 = scmp.eq.s32.totalorder %s23, 0
      %p103 = por %p101, %p102
      %s104 = ssub.s32 %s24, %s43
      %s105 = ssub.s32 %s25, %s39
      %s106 = sor.u32 %s104, %s105
      %p107 = scmp.eq.s32.totalorder %s106, 0
      %s109 = sadd.s32 %s108, 1
      %s110 = scalar_select %p107, %s108, %s109
      %p113 = pneg %p107
      %p114 = scmp.eq.s32.totalorder %s17, 1
      %p115 = por %p113, %p114
      %p116 = scmp.ne.s32.totalorder %s108, %s111
      %p117 = scmp.eq.s32.totalorder %s17, 0
      %p118 = por %p116, %p117
      %p119 = scmp.ne.s32.totalorder %s108, %s111
      %p120 = scmp.eq.s32.totalorder %s22, 1
      %p121 = por %p119, %p120
      %p122 = scmp.ne.s32.totalorder %s111, %s112
      %p123 = scmp.eq.s32.totalorder %s22, 0
      %p124 = por %p122, %p123
      %p125 = scmp.ne.s32.totalorder %s111, %s112
      %p126 = scmp.eq.s32.totalorder %s23, 1
      %p127 = por %p125, %p126
      %p129 = scmp.ne.s32.totalorder %s112, %s128
      %p130 = scmp.eq.s32.totalorder %s23, 0
      %p131 = por %p129, %p130
      %p132 = scmp.le.s32.totalorder 1, %s17
      %p133 = scmp.lt.s32.totalorder %s17, 3
      %p134 = pnand %p132, %p133
      %p135 = pneg %p134
      // Predicated region
      $region9: #{tpu_custom_call.1} parent=5 // pred_check
        _
      $region10: #{tpu_custom_call.1} parent=5 // pred_check_branch
        %137 = sbr.rel (%p134) target = $region12
      $region11: #{tpu_custom_call.1} parent=5 // pred_region
        %s138 = ssub.s32 %s17, 1
      $region12: #{tpu_custom_call.1} parent=5 // pred_fallthru
        _
      %p139 = scmp.lt.s32.totalorder %s17, 2
      // Predicated region
      $region13: #{tpu_custom_call.1} parent=5 // pred_check
        %p140 = pneg %p139
      $region14: #{tpu_custom_call.1} parent=5 // pred_check_branch
        %142 = sbr.rel (%p140) target = $region16
      $region15: #{tpu_custom_call.1} parent=5 // pred_region
        // Predicated region
        $region17: #{tpu_custom_call.1} parent=15 // pred_check
          %p143 = pneg %p60
        $region18: #{tpu_custom_call.1} parent=15 // pred_check_branch
          %145 = sbr.rel (%p143) target = $region20
        $region19: #{tpu_custom_call.1} parent=15 // pred_region
          %s146 = sand.u32 %s50, 1
          %s147 = scalar_lea.sflag [#allocation4], %s146
          %s148 = sand.u32 %s50, 1
          %s149 = smul.addr %s148, 8
          %s150 = scalar_lea.vmem [#allocation3], %s149
          %s151 = sadd.s32 %s25, %s26
          %s153 = ssub.s32 128, 128
          %154 = vsyncadd %s147, %s153
          %s155 = sadd.s32 %s151, %s24
          %s156 = smul.addr %s155, 128
          %s157 = scalar_lea.hbm %s0, %s156
          %s159 = sshll.u32 %s150, 4
          %s160 = int_to_ptr.vmem [resolvable:$true] %s159
          %162 = dma.hbm_to_vmem [thread:$0]  %s157, 128, %s160, %s147
        $region20: #{tpu_custom_call.1} parent=15 // pred_fallthru
          _
        // Predicated region
        $region21: #{tpu_custom_call.1} parent=15 // pred_check
          %p163 = pneg %p90
        $region22: #{tpu_custom_call.1} parent=15 // pred_check_branch
          %165 = sbr.rel (%p163) target = $region24
        $region23: #{tpu_custom_call.1} parent=15 // pred_region
          %s166 = sand.u32 %s80, 1
          %s167 = scalar_lea.sflag [#allocation7], %s166
          %s168 = sand.u32 %s80, 1
          %s169 = smul.addr %s168, 16
          %s170 = scalar_lea.vmem [#allocation6], %s169
          %s171 = sadd.s32 %s25, %s26
          %s173 = ssub.s32 256, 256
          %174 = vsyncadd %s167, %s173
          %s175 = smul.addr %s24, 2
          %s176 = sadd.s32 %s171, %s175
          %s177 = smul.addr %s176, 128
          %s178 = scalar_lea.hbm %s1, %s177
          %s179 = sshll.u32 %s170, 4
          %s180 = int_to_ptr.vmem [resolvable:$true] %s179
          %185 = dma.hbm_to_vmem [thread:$0]  %s178, 256, %s180, %s167, 128, 128, 8
        $region24: #{tpu_custom_call.1} parent=15 // pred_fallthru
          _
      $region16: #{tpu_custom_call.1} parent=5 // pred_fallthru
        _
      %p186 = scmp.le.s32.totalorder 1, %s17
      %p187 = scmp.lt.s32.totalorder %s17, 3
      %p188 = pnand %p186, %p187
      %p189 = pneg %p188
      // Predicated region
      $region25: #{tpu_custom_call.1} parent=5 // pred_check
        _
      $region26: #{tpu_custom_call.1} parent=5 // pred_check_branch
        %191 = sbr.rel (%p188) target = $region28
      $region27: #{tpu_custom_call.1} parent=5 // pred_region
        %s192 = ssub.s32 %s17, 1
        %s193 = sand.u32 %s53, 1
        %s194 = scalar_lea.sflag [#allocation4], %s193
        %s195 = sand.u32 %s53, 1
        %s196 = smul.addr %s195, 8
        %s197 = scalar_lea.vmem [#allocation3], %s196
        // Predicated region
        $region29: #{tpu_custom_call.1} parent=27 // pred_check
          %p198 = pneg %p66
        $region30: #{tpu_custom_call.1} parent=27 // pred_check_branch
          %200 = sbr.rel (%p198) target = $region32
        $region31: #{tpu_custom_call.1} parent=27 // pred_region
          %201 = dma.done %s194, 128
        $region32: #{tpu_custom_call.1} parent=27 // pred_fallthru
          _
        %s202 = sand.u32 %s83, 1
        %s203 = scalar_lea.sflag [#allocation7], %s202
        %s204 = sand.u32 %s83, 1
        %s205 = smul.addr %s204, 16
        %s206 = scalar_lea.vmem [#allocation6], %s205
        // Predicated region
        $region33: #{tpu_custom_call.1} parent=27 // pred_check
          %p207 = pneg %p96
        $region34: #{tpu_custom_call.1} parent=27 // pred_check_branch
          %209 = sbr.rel (%p207) target = $region36
        $region35: #{tpu_custom_call.1} parent=27 // pred_region
          %210 = dma.done %s203, 256
        $region36: #{tpu_custom_call.1} parent=27 // pred_fallthru
          _
        %s211 = sand.u32 %s53, 1
        %s212 = scalar_lea.sflag [#allocation4], %s211
        %s213 = sand.u32 %s53, 1
        %s214 = smul.addr %s213, 8
        %s215 = scalar_lea.vmem [#allocation3], %s214
        %p216 = pneg %p66
        %p217 = pneg %p63
        %s218 = sand.u32 %s83, 1
        %s219 = scalar_lea.sflag [#allocation7], %s218
        %s220 = sand.u32 %s83, 1
        %s221 = smul.addr %s220, 16
        %s222 = scalar_lea.vmem [#allocation6], %s221
        %p223 = pneg %p96
        %p224 = pneg %p93
        %p225 = pneg %p124
        %p226 = pneg %p121
        %s227 = sand.u32 %s111, 1
        %s228 = scalar_lea.sflag [#allocation5], %s227
        %s229 = sand.u32 %s111, 1
        %s230 = smul.addr %s229, 8
        %s231 = scalar_lea.vmem [#allocation8], %s230
        %s232 = sadd.s32 %s28, %s29
        %s233 = sadd.s32 %s28, %s29
        %p234 = scmp.eq.s32.totalorder %s29, 0
        // Predicated region
        $region37: #{tpu_custom_call.1} parent=27 // pred_check
          %p235 = pneg %p234
        $region38: #{tpu_custom_call.1} parent=27 // pred_check_branch
          %237 = sbr.rel (%p235) target = $region40
        $region39: #{tpu_custom_call.1} parent=27 // pred_region
          %238 = vst [vmem:[#allocation2] sm:$0xff] 0.0
        $region40: #{tpu_custom_call.1} parent=27 // pred_fallthru
          _
        %v239 = vld [vmem:[%s197] sm:$0xff]
        %v240 = vld [vmem:[%s206] sm:$0xff]
        %s241 = scalar_lea.vmem %s206, 8 [#allocation6]
        %v242 = vld [vmem:[%s241] sm:$0xff]
        %v243 = vadd.f32 %v239, 1e-12
        %v244 = vlog2.pop %v243
        %v245 = vmul.f32 %v244, 0.6931472
        %v246 = vsub.f32 1.0, %v239
        %v247 = vadd.f32 %v246, 1e-12
        %v248 = vlog2.pop %v247
        %v249 = vmul.f32 %v248, 0.6931472
        %v250 = vsub.f32 %v240, 1.0
        %v251 = vmul.f32 %v250, %v249
        %v252 = vmul.f32 %v240, %v245
        %v253 = vsub.f32 %v251, %v252
        %v254 = vmul.f32 %v242, %v253
        %v255 = vld [vmem:[#allocation2] sm:$0xff]
        %v256 = vadd.f32 %v254, 0.0
        %v257 = vadd.f32 %v255, %v256
        %258 = vst [vmem:[#allocation2] sm:$0xff] %v257
        // Predicated region
        $region41: #{tpu_custom_call.1} parent=27 // pred_check
          %p259 = pneg %p234
        $region42: #{tpu_custom_call.1} parent=27 // pred_check_branch
          %261 = sbr.rel (%p259) target = $region44
        $region43: #{tpu_custom_call.1} parent=27 // pred_region
          %v262 = vld [vmem:[#allocation2] sm:$0xff]
          %263 = vst [vmem:[%s231] sm:$0xff] %v262
        $region44: #{tpu_custom_call.1} parent=27 // pred_fallthru
          _
        %s264 = sand.u32 %s111, 1
        %s265 = scalar_lea.sflag [#allocation5], %s264
        %s266 = sand.u32 %s111, 1
        %s267 = smul.addr %s266, 8
        %s268 = scalar_lea.vmem [#allocation8], %s267
        // Predicated region
        $region45: #{tpu_custom_call.1} parent=27 // pred_check
          %p269 = pneg %p121
        $region46: #{tpu_custom_call.1} parent=27 // pred_check_branch
          %271 = sbr.rel (%p269) target = $region48
        $region47: #{tpu_custom_call.1} parent=27 // pred_region
          %s273 = ssub.s32 128, 128
          %274 = vsyncadd %s265, %s273
          %s275 = sadd.s32 %s28, %s27
          %s276 = smul.addr %s275, 128
          %s277 = scalar_lea.hbm %s2, %s276
          %s279 = sshll.u32 %s268, 4
          %s280 = int_to_ptr.vmem [resolvable:$true] %s279
          %282 = dma.vmem_to_hbm [thread:$0]  %s280, 128, %s277, %s265
        $region48: #{tpu_custom_call.1} parent=27 // pred_fallthru
          _
      $region28: #{tpu_custom_call.1} parent=5 // pred_fallthru
        _
      %p283 = scmp.le.s32.totalorder 2, %s17
      // Predicated region
      $region49: #{tpu_custom_call.1} parent=5 // pred_check
        %p284 = pneg %p283
      $region50: #{tpu_custom_call.1} parent=5 // pred_check_branch
        %286 = sbr.rel (%p284) target = $region52
      $region51: #{tpu_custom_call.1} parent=5 // pred_region
        %s287 = ssub.s32 %s17, 2
        // Predicated region
        $region53: #{tpu_custom_call.1} parent=51 // pred_check
          %p288 = pneg %p127
        $region54: #{tpu_custom_call.1} parent=51 // pred_check_branch
          %290 = sbr.rel (%p288) target = $region56
        $region55: #{tpu_custom_call.1} parent=51 // pred_region
          %s291 = sand.u32 %s112, 1
          %s292 = scalar_lea.sflag [#allocation5], %s291
          %s293 = sand.u32 %s112, 1
          %s294 = smul.addr %s293, 8
          %s295 = scalar_lea.vmem [#allocation8], %s294
          %296 = dma.done %s292, 128
        $region56: #{tpu_custom_call.1} parent=51 // pred_fallthru
          _
      $region52: #{tpu_custom_call.1} parent=5 // pred_fallthru
        _
    $region6: #{tpu_custom_call.1} parent=1 // loop_footer
      %s21 = sadd.s32 1, %s17
    $region7: #{tpu_custom_call.1} parent=1 // loop_footer_branch
      %16 = sbr.rel target = $region3
    $region8: #{tpu_custom_call.1} parent=1 // loop_exit
      _
    %297 = vsyncpa [#allocation4], 1
    %s298 = scalar_lea.sflag [#allocation4], 1
    %299 = vsyncpa %s298, 1
    %300 = vsyncpa [#allocation7], 1
    %s301 = scalar_lea.sflag [#allocation7], 1
    %302 = vsyncpa %s301, 1
    %303 = vsyncpa [#allocation5], 1
    %s304 = scalar_lea.sflag [#allocation5], 1
    %305 = vsyncpa %s304, 1

</llo_original>
